<compile_context>
chip_gen: v7x
topology: tpu7x:2x2x1
jax: 0.10.0
libtpu: 0.0.40
codegen_flags: <defaults>
</compile_context>

<pallas_src>
import math

import jax
import jax.numpy as jnp
from jax.experimental import pallas as pl
from jax.experimental.pallas import tpu as pltpu


def _pos_enc_kernel(x_ref, pe_ref, o_ref):
    """One grid step.

    x_ref : (tb, ts, D)  VMEM
    pe_ref: (ts, D)      VMEM (batch-invariant block; not re-fetched across batch steps)
    o_ref : (tb, ts, D)  VMEM
    """
    # Pure VPU add; pe broadcasts over the leading (batch-tile) axis.
    o_ref[...] = x_ref[...] + pe_ref[...]


def make_positional_encoding(max_seq_len: int, hidden_dim: int,
                             dtype=jnp.float32) -> jax.Array:
    """Host-side buffer construction, identical math to the PyTorch __init__."""
    position = jnp.arange(max_seq_len, dtype=jnp.float32)[:, None]           # (S, 1)
    div_term = jnp.exp(jnp.arange(0, hidden_dim, 2, dtype=jnp.float32)
                       * (-math.log(10000.0) / hidden_dim))                  # (D/2,)
    angles = position * div_term                                             # (S, D/2)
    pe = jnp.zeros((max_seq_len, hidden_dim), dtype=jnp.float32)
    pe = pe.at[:, 0::2].set(jnp.sin(angles))
    pe = pe.at[:, 1::2].set(jnp.cos(angles))
    return pe.astype(dtype)


def _largest_aligned_divisor(n: int, cap: int, align: int) -> int:
    """Largest t <= cap with n % t == 0 and t % align == 0; falls back to n."""
    if n <= cap:
        return n
    t = cap - (cap % align)
    while t >= align:
        if n % t == 0:
            return t
        t -= align
    return n  # no aligned divisor found: use the full extent (always correct)


def positional_encoding_add(x: jax.Array, pe: jax.Array) -> jax.Array:
    """x: (B, S, D).  pe: (max_seq_len, D) buffer; only the first S rows are used."""
    B, S, D = x.shape
    assert pe.shape[0] >= S and pe.shape[1] == D
    # Mirrors `self.pe[:, :x.size(1)]` (glue, plain JAX). Cast so the in-kernel add
    # and output dtype match x.
    pe_s = pe[:S].astype(x.dtype)

    itemsize = jnp.dtype(x.dtype).itemsize

    # Seq tile: full S when small; otherwise the largest 8-aligned divisor <= 512
    # (keeps (8,128) tiling constraints satisfied and blocks well inside VMEM).
    ts = _largest_aligned_divisor(S, 512, 8)
    s_tiles = S // ts

    # Batch tile: pack as many batch rows per step as fit in a ~2 MiB block.
    max_tb = max(1, (2 * 1024 * 1024) // max(1, ts * D * itemsize))
    tb = 1
    for cand in range(min(B, max_tb), 0, -1):
        if B % cand == 0:
            tb = cand
            break
    b_tiles = B // tb

    return pl.pallas_call(
        _pos_enc_kernel,
        out_shape=jax.ShapeDtypeStruct((B, S, D), x.dtype),
        grid_spec=pltpu.PrefetchScalarGridSpec(
            num_scalar_prefetch=0,
            # seq tile is the slow axis, batch the fast axis: the pe block index is
            # constant across consecutive batch steps -> pe DMA'd once per seq tile.
            grid=(s_tiles, b_tiles),
            in_specs=[
                pl.BlockSpec((tb, ts, D), lambda s, b: (b, s, 0)),   # x tile
                pl.BlockSpec((ts, D), lambda s, b: (s, 0)),          # pe tile (b-invariant)
            ],
            out_specs=pl.BlockSpec((tb, ts, D), lambda s, b: (b, s, 0)),
        ),
        compiler_params=pltpu.CompilerParams(
            dimension_semantics=("parallel", "parallel"),
        ),
    )(x, pe_s)


def _reference(x, pe):
    """Pure-JAX reference mirroring the PyTorch forward."""
    return x + pe[None, : x.shape[1]].astype(x.dtype)


if __name__ == "__main__":
    B, S, D = 2, 8, 32
    MAX_SEQ = 16  # buffer may be longer than the input sequence, as in the module

    key = jax.random.PRNGKey(0)
    x = jax.random.normal(key, (B, S, D), dtype=jnp.float32)

    pe = make_positional_encoding(MAX_SEQ, D)

    out = positional_encoding_add(x, pe)
    out = jax.block_until_ready(out)

    ref = _reference(x, pe)
    assert out.shape == (B, S, D)
    assert jnp.allclose(out, ref, atol=1e-6, rtol=1e-6), "mismatch vs reference"

    print("KERNEL_OK")
</pallas_src>

<mosaic_0001>
module attributes {stable_mosaic.version = 11 : i64} {
  func.func @_pos_enc_kernel(%arg0: i32, %arg1: i32, %arg2: memref<2x8x32xf32, #tpu.memory_space<vmem>>, %arg3: memref<8x32xf32, #tpu.memory_space<vmem>>, %arg4: memref<2x8x32xf32, #tpu.memory_space<vmem>>) attributes {dimension_semantics = [#tpu.dimension_semantics<parallel>, #tpu.dimension_semantics<parallel>], iteration_bounds = array<i64: 1, 1>, scalar_prefetch = 0 : i64, scratch_operands = 0 : i64, tpu.core_type = #tpu.core_type<tc>, window_params = [{transform_indices = @transform_0, window_bounds = array<i64: 2, 8, 32>}, {transform_indices = @transform_1, window_bounds = array<i64: 8, 32>}, {transform_indices = @transform_2, window_bounds = array<i64: 2, 8, 32>}]} {
    %c0 = arith.constant 0 : index
    %c0_0 = arith.constant 0 : index
    %c0_1 = arith.constant 0 : index
    %0 = vector.load %arg2[%c0, %c0_0, %c0_1] : memref<2x8x32xf32, #tpu.memory_space<vmem>>, vector<2x8x32xf32>
    %c0_2 = arith.constant 0 : index
    %c0_3 = arith.constant 0 : index
    %1 = vector.load %arg3[%c0_2, %c0_3] : memref<8x32xf32, #tpu.memory_space<vmem>>, vector<8x32xf32>
    %2 = vector.shape_cast %1 : vector<8x32xf32> to vector<1x8x32xf32>
    %3 = vector.broadcast %2 : vector<1x8x32xf32> to vector<2x8x32xf32>
    %4 = arith.addf %0, %3 : vector<2x8x32xf32>
    %c0_4 = arith.constant 0 : index
    %c0_5 = arith.constant 0 : index
    %c0_6 = arith.constant 0 : index
    %5 = vector.load %arg4[%c0_4, %c0_5, %c0_6] : memref<2x8x32xf32, #tpu.memory_space<vmem>>, vector<2x8x32xf32>
    tpu.vector_store %arg4[%c0_4, %c0_5, %c0_6], %4 {strides = array<i32>} : memref<2x8x32xf32, #tpu.memory_space<vmem>>, vector<2x8x32xf32>,
    return
  }
  func.func @transform_0(%arg0: i32, %arg1: i32) -> (i32, i32, i32) {
    %c0_i32 = arith.constant 0 : i32
    %c0_i32_0 = arith.constant 0 : i32
    return %arg1, %arg0, %c0_i32 : i32, i32, i32
  }
  func.func @transform_1(%arg0: i32, %arg1: i32) -> (i32, i32) {
    %c0_i32 = arith.constant 0 : i32
    %c0_i32_0 = arith.constant 0 : i32
    return %arg0, %c0_i32 : i32, i32
  }
  func.func @transform_2(%arg0: i32, %arg1: i32) -> (i32, i32, i32) {
    %c0_i32 = arith.constant 0 : i32
    %c0_i32_0 = arith.constant 0 : i32
    return %arg1, %arg0, %c0_i32 : i32, i32, i32
  }
}

</mosaic_0001>

<llo_original>
// kernel: tpu_custom_call.1
$region0: #{tpu_custom_call.1}
  #allocation0 [shape = 'u32[]', space=smem, size = 0x4, offset = 0x4, fixed_abs, tag = 'smem constant byte address 0x4 - core index']
  #allocation1 [shape = 'u32[144,128]{1,0:T(1,128)}', space=vmem, size = 0x12000, scoped, tag = 'internal scratch']
  %s0 = inlined_call_operand.hbm [shape: f32[2,8,32], index: 0, kind: input, shape index: {}]
  %s1 = inlined_call_operand.hbm [shape: f32[8,32], index: 1, kind: input, shape index: {}]
  %s2 = inlined_call_operand.hbm [shape: f32[2,8,32], index: 2, kind: output, shape index: {}]
  %s3 = sld [smem:[#allocation0]]
  $region26: #{tpu_custom_call.1} parent=0
    _
  %s5 = ssub.s32 1, %s3
  %s6 = scalar_select 0, %s5, %s3
  $region1: #{tpu_custom_call.1} parent=0
    #allocation2 [shape = 'u8[8192]{0}', space=vmem, size = 0x2000, scoped, tag = 'input window, operand 0, single buffered']
    #allocation3 [shape = 's32[1]{0}', space=sflag, size = 0x4, scoped, tag = 'scoped memory for tpu_custom_call.1']
    #allocation4 [shape = 's32[1]{0}', space=sflag, size = 0x4, scoped, tag = 'scoped memory for tpu_custom_call.1']
    #allocation5 [shape = 'u8[4096]{0}', space=vmem, size = 0x1000, scoped, tag = 'input window, operand 1, single buffered']
    #allocation6 [shape = 's32[1]{0}', space=sflag, size = 0x4, scoped, tag = 'scoped memory for tpu_custom_call.1']
    #allocation7 [shape = 'u8[8192]{0}', space=vmem, size = 0x2000, scoped, tag = 'output window, operand 0, single buffered']
    %7 = vsyncpa [#allocation3], 0
    %8 = vsyncpa [#allocation6], 0
    %9 = vsyncpa [#allocation4], 0
    // Predicated region
    $region2: #{tpu_custom_call.1} parent=1 // pred_check
      _
    $region3: #{tpu_custom_call.1} parent=1 // pred_check_branch
      %11 = sbr.rel (0) target = $region5
    $region4: #{tpu_custom_call.1} parent=1 // pred_region
      %s13 = ssub.s32 256, 256
      %14 = vsyncadd [#allocation3], %s13
      %s15 = sshll.u32 [#allocation2], 4
      %s16 = int_to_ptr.vmem [resolvable:$true] %s15
      %21 = dma.hbm_to_vmem [thread:$0]  %s0, 256, %s16, [#allocation3], 128, 128, 8
    $region5: #{tpu_custom_call.1} parent=1 // pred_fallthru
      _
    // Predicated region
    $region6: #{tpu_custom_call.1} parent=1 // pred_check
      _
    $region7: #{tpu_custom_call.1} parent=1 // pred_check_branch
      %23 = sbr.rel (0) target = $region9
    $region8: #{tpu_custom_call.1} parent=1 // pred_region
      %s25 = ssub.s32 128, 128
      %26 = vsyncadd [#allocation6], %s25
      %s28 = sshll.u32 [#allocation5], 4
      %s29 = int_to_ptr.vmem [resolvable:$true] %s28
      %31 = dma.hbm_to_vmem [thread:$0]  %s1, 128, %s29, [#allocation6]
    $region9: #{tpu_custom_call.1} parent=1 // pred_fallthru
      _
    // Predicated region
    $region10: #{tpu_custom_call.1} parent=1 // pred_check
      _
    $region11: #{tpu_custom_call.1} parent=1 // pred_check_branch
      %33 = sbr.rel (0) target = $region13
    $region12: #{tpu_custom_call.1} parent=1 // pred_region
      %34 = dma.done [#allocation3], 256
    $region13: #{tpu_custom_call.1} parent=1 // pred_fallthru
      _
    // Predicated region
    $region14: #{tpu_custom_call.1} parent=1 // pred_check
      _
    $region15: #{tpu_custom_call.1} parent=1 // pred_check_branch
      %36 = sbr.rel (0) target = $region17
    $region16: #{tpu_custom_call.1} parent=1 // pred_region
      %37 = dma.done [#allocation6], 128
    $region17: #{tpu_custom_call.1} parent=1 // pred_fallthru
      _
    %v38 = vld [vmem:[#allocation2] sm:$0xff]
    %v39 = vld [vmem:[#allocation2 + $0x8] sm:$0xff]
    %v40 = vld [vmem:[#allocation5] sm:$0xff]
    %v41 = vadd.f32 %v38, %v40
    %v42 = vadd.f32 %v39, %v40
    %vm43 = vcmask 261120
    %44 = vst.msk [vmem:[#allocation7] sm:$0xff] %vm43, %v41
    %45 = vst.msk [vmem:[#allocation7 + $0x8] sm:$0xff] %vm43, %v42
    // Predicated region
    $region18: #{tpu_custom_call.1} parent=1 // pred_check
      _
    $region19: #{tpu_custom_call.1} parent=1 // pred_check_branch
      %47 = sbr.rel (0) target = $region21
    $region20: #{tpu_custom_call.1} parent=1 // pred_region
      %s49 = ssub.s32 256, 256
      %50 = vsyncadd [#allocation4], %s49
      %s51 = sshll.u32 [#allocation7], 4
      %s52 = int_to_ptr.vmem [resolvable:$true] %s51
      %57 = dma.vmem_to_hbm [thread:$0]  %s52, 256, %s2, [#allocation4], 128, 128, 8
    $region21: #{tpu_custom_call.1} parent=1 // pred_fallthru
      _
    // Predicated region
    $region22: #{tpu_custom_call.1} parent=1 // pred_check
      _
    $region23: #{tpu_custom_call.1} parent=1 // pred_check_branch
      %59 = sbr.rel (0) target = $region25
    $region24: #{tpu_custom_call.1} parent=1 // pred_region
      %60 = dma.done [#allocation4], 256
    $region25: #{tpu_custom_call.1} parent=1 // pred_fallthru
      _
    %61 = vsyncpa [#allocation3], 1
    %62 = vsyncpa [#allocation6], 1
    %63 = vsyncpa [#allocation4], 1

</llo_original>
